<compile_context>
chip_gen: v5e
topology: v5e:2x2
jax: 0.10.0
libtpu: 0.0.40
codegen_flags: <defaults>
</compile_context>

<pallas_src>
import functools

import jax
import jax.numpy as jnp
from jax.experimental import pallas as pl
from jax.experimental.pallas import tpu as pltpu

TEMPERATURE = 0.07


def _round_up(x: int, m: int) -> int:
    return (x + m - 1) // m * m


def _infonce_kernel(user_ref, pos_ref, neg_ref, loss_sum_ref, *, batch, tile_b):
    inv_t = jnp.float32(1.0 / TEMPERATURE)

    # Compute in f32: bf16 inputs still halve HBM/DMA traffic (cast happens
    # in-register), and v5e's VPU/EUP have no bf16 path anyway.
    u = user_ref[...].astype(jnp.float32) * inv_t          # (TILE_B, D), scaled once
    p = pos_ref[...].astype(jnp.float32)[:, 0, :]          # (TILE_B, D)
    n = neg_ref[...].astype(jnp.float32)                   # (TILE_B, N, D)

    # VPU broadcast-multiply + lane (XLU) reduction; avoids per-example
    # 1xD @ DxN MXU matvecs at sub-1% MXU utilization.
    pos_logit = jnp.sum(u * p, axis=-1, keepdims=True)     # (TILE_B, 1)
    neg_logits = jnp.sum(u[:, None, :] * n, axis=-1)       # (TILE_B, N)

    # logsumexp over [pos, neg_0..neg_{N-1}] with the positive folded in
    # algebraically (no lane-axis concatenate of a (B,1) onto a (B,N)).
    m = jnp.maximum(jnp.max(neg_logits, axis=-1, keepdims=True), pos_logit)   # (TILE_B, 1)
    denom = jnp.exp(pos_logit - m) + jnp.sum(jnp.exp(neg_logits - m),
                                             axis=-1, keepdims=True)          # (TILE_B, 1)
    loss = jnp.log(denom) + m - pos_logit                                     # (TILE_B, 1)

    # Zero out padded batch rows, then reduce to one scalar per tile so the
    # HBM writeback is a single float (no masked lane-1 stores of B losses).
    row = pl.program_id(0) * tile_b + jax.lax.broadcasted_iota(
        jnp.int32, (tile_b, 1), 0)
    loss = jnp.where(row < batch, loss, 0.0)
    loss_sum_ref[...] = jnp.sum(loss, axis=0, keepdims=True)[None]            # (1, 1, 1)


def info_nce_loss(user_emb, pos_item_emb, neg_item_emb):
    """Pallas-backed InfoNCE loss. Returns a scalar (mean over batch)."""
    B, D = user_emb.shape
    _, N, _ = neg_item_emb.shape
    itemsize = max(user_emb.dtype.itemsize, pos_item_emb.dtype.itemsize,
                   neg_item_emb.dtype.itemsize)

    # Largest batch tile whose double-buffered inputs fit a conservative VMEM
    # budget (safe under v7x's 64 MiB physical / 32 MiB default-scoped VMEM;
    # f32 compute temporaries add roughly another tile on top of this).
    input_budget_bytes = 8 * 1024 * 1024
    row_bytes = 2 * (N + 2) * D * itemsize       # double-buffered bytes per batch row
    tile_b = input_budget_bytes // max(row_bytes, 1)
    tile_b = max(8, min(1024, (tile_b // 8) * 8))
    tile_b = min(tile_b, _round_up(B, 8))

    b_pad = _round_up(B, tile_b)
    if b_pad != B:
        pad = b_pad - B
        user_emb = jnp.pad(user_emb, ((0, pad), (0, 0)))
        pos_item_emb = jnp.pad(pos_item_emb, ((0, pad), (0, 0), (0, 0)))
        neg_item_emb = jnp.pad(neg_item_emb, ((0, pad), (0, 0), (0, 0)))
    num_tiles = b_pad // tile_b

    # TODO(synk): for very large negative pools (N*D exceeding one tile), add
    # an "arbitrary" grid axis over N with an online (flash-style) max/lse
    # accumulator in VMEM scratch instead of shrinking TILE_B.

    kernel = functools.partial(_infonce_kernel, batch=B, tile_b=tile_b)

    cost = pl.CostEstimate(
        flops=2 * b_pad * (N + 1) * D,
        transcendentals=b_pad * (N + 2),
        bytes_accessed=b_pad * (N + 2) * D * itemsize + num_tiles * 4,
    )

    per_tile_sums = pl.pallas_call(
        kernel,
        out_shape=jax.ShapeDtypeStruct((num_tiles, 1, 1), jnp.float32),
        grid_spec=pltpu.PrefetchScalarGridSpec(
            num_scalar_prefetch=0,
            grid=(num_tiles,),
            in_specs=[
                pl.BlockSpec((tile_b, D), lambda i: (i, 0)),
                pl.BlockSpec((tile_b, 1, D), lambda i: (i, 0, 0)),
                pl.BlockSpec((tile_b, N, D), lambda i: (i, 0, 0)),
            ],
            out_specs=pl.BlockSpec((1, 1, 1), lambda i: (i, 0, 0)),
        ),
        compiler_params=pltpu.CompilerParams(
            dimension_semantics=("parallel",),   # batch tiles split across TCs (megacore/v7x)
            vmem_limit_bytes=32 * 1024 * 1024,
        ),
        cost_estimate=cost,
    )(user_emb, pos_item_emb, neg_item_emb)

    return jnp.sum(per_tile_sums) / jnp.float32(B)


def _reference_loss(user_emb, pos_item_emb, neg_item_emb):
    """Pure-JAX reference for validation."""
    pos = jnp.einsum('bd,bnd->bn', user_emb, pos_item_emb) / TEMPERATURE
    neg = jnp.einsum('bd,bnd->bn', user_emb, neg_item_emb) / TEMPERATURE
    logits = jnp.concatenate([pos, neg], axis=1)
    lse = jax.scipy.special.logsumexp(logits, axis=1)
    return jnp.mean(lse - logits[:, 0])


if __name__ == "__main__":
    B, N, D = 8, 8, 32  # batch, negative-sample count, embedding dim

    key = jax.random.PRNGKey(0)
    k_u, k_p, k_n = jax.random.split(key, 3)
    user_emb = jax.random.normal(k_u, (B, D), dtype=jnp.float32)
    pos_item_emb = jax.random.normal(k_p, (B, 1, D), dtype=jnp.float32)
    neg_item_emb = jax.random.normal(k_n, (B, N, D), dtype=jnp.float32)

    loss = info_nce_loss(user_emb, pos_item_emb, neg_item_emb)
    loss = jax.block_until_ready(loss)

    ref = _reference_loss(user_emb, pos_item_emb, neg_item_emb)
    assert jnp.allclose(loss, ref, rtol=1e-5, atol=1e-5), (loss, ref)

    print("KERNEL_OK")
</pallas_src>

<mosaic_0001>
module attributes {stable_mosaic.version = 11 : i64} {
  func.func @_infonce_kernel(%arg0: i32, %arg1: memref<8x32xf32, #tpu.memory_space<vmem>>, %arg2: memref<8x1x32xf32, #tpu.memory_space<vmem>>, %arg3: memref<8x8x32xf32, #tpu.memory_space<vmem>>, %arg4: memref<1x1x1xf32, #tpu.memory_space<vmem>>) attributes {dimension_semantics = [#tpu.dimension_semantics<parallel>], iteration_bounds = array<i64: 1>, scalar_prefetch = 0 : i64, scratch_operands = 0 : i64, tpu.core_type = #tpu.core_type<tc>, window_params = [{transform_indices = @transform_0, window_bounds = array<i64: 8, 32>}, {transform_indices = @transform_1, window_bounds = array<i64: 8, 1, 32>}, {transform_indices = @transform_2, window_bounds = array<i64: 8, 8, 32>}, {transform_indices = @transform_3, window_bounds = array<i64: 1, 1, 1>}]} {
    %c0 = arith.constant 0 : index
    %c0_0 = arith.constant 0 : index
    %0 = vector.load %arg1[%c0, %c0_0] : memref<8x32xf32, #tpu.memory_space<vmem>>, vector<8x32xf32>
    %cst = arith.constant 14.2857141 : f32
    %1 = vector.broadcast %cst : f32 to vector<8x32xf32>
    %2 = arith.mulf %0, %1 : vector<8x32xf32>
    %c0_1 = arith.constant 0 : index
    %c0_2 = arith.constant 0 : index
    %c0_3 = arith.constant 0 : index
    %3 = vector.load %arg2[%c0_1, %c0_2, %c0_3] : memref<8x1x32xf32, #tpu.memory_space<vmem>>, vector<8x1x32xf32>
    %4 = vector.shape_cast %3 : vector<8x1x32xf32> to vector<8x32xf32>
    %c0_4 = arith.constant 0 : index
    %c0_5 = arith.constant 0 : index
    %c0_6 = arith.constant 0 : index
    %5 = vector.load %arg3[%c0_4, %c0_5, %c0_6] : memref<8x8x32xf32, #tpu.memory_space<vmem>>, vector<8x8x32xf32>
    %6 = arith.mulf %2, %4 : vector<8x32xf32>
    %cst_7 = arith.constant dense<0.000000e+00> : vector<8xf32>
    %7 = vector.multi_reduction <add>, %6, %cst_7 [1] : vector<8x32xf32> to vector<8xf32>
    %8 = vector.shape_cast %7 : vector<8xf32> to vector<8x1xf32>
    %9 = vector.shape_cast %2 : vector<8x32xf32> to vector<8x1x32xf32>
    %10 = vector.broadcast %9 : vector<8x1x32xf32> to vector<8x8x32xf32>
    %11 = arith.mulf %10, %5 : vector<8x8x32xf32>
    %cst_8 = arith.constant dense<0.000000e+00> : vector<8x8xf32>
    %12 = vector.multi_reduction <add>, %11, %cst_8 [2] : vector<8x8x32xf32> to vector<8x8xf32>
    %cst_9 = arith.constant dense<0xFF800000> : vector<8xf32>
    %13 = vector.multi_reduction <maximumf>, %12, %cst_9 [1] : vector<8x8xf32> to vector<8xf32>
    %14 = vector.shape_cast %13 : vector<8xf32> to vector<8x1xf32>
    %15 = arith.maximumf %14, %8 : vector<8x1xf32>
    %16 = arith.subf %8, %15 : vector<8x1xf32>
    %17 = math.exp %16 : vector<8x1xf32>
    %18 = vector.broadcast %15 : vector<8x1xf32> to vector<8x8xf32>
    %19 = arith.subf %12, %18 : vector<8x8xf32>
    %20 = math.exp %19 : vector<8x8xf32>
    %cst_10 = arith.constant dense<0.000000e+00> : vector<8xf32>
    %21 = vector.multi_reduction <add>, %20, %cst_10 [1] : vector<8x8xf32> to vector<8xf32>
    %22 = vector.shape_cast %21 : vector<8xf32> to vector<8x1xf32>
    %23 = arith.addf %17, %22 : vector<8x1xf32>
    %24 = math.log %23 : vector<8x1xf32>
    %25 = arith.addf %24, %15 : vector<8x1xf32>
    %26 = arith.subf %25, %8 : vector<8x1xf32>
    %c8_i32 = arith.constant 8 : i32
    %27 = arith.muli %arg0, %c8_i32 : i32
    %28 = tpu.iota {dimensions = array<i32: 0>} : vector<8x1xi32>
    %29 = vector.broadcast %27 : i32 to vector<8x1xi32>
    %30 = arith.addi %29, %28 : vector<8x1xi32>
    %c8_i32_11 = arith.constant 8 : i32
    %31 = vector.broadcast %c8_i32_11 : i32 to vector<8x1xi32>
    %32 = arith.cmpi slt, %30, %31 : vector<8x1xi32>
    %cst_12 = arith.constant 0.000000e+00 : f32
    %33 = vector.broadcast %cst_12 : f32 to vector<8x1xf32>
    %34 = arith.select %32, %26, %33 : vector<8x1xi1>, vector<8x1xf32>
    %cst_13 = arith.constant dense<0.000000e+00> : vector<1xf32>
    %35 = vector.multi_reduction <add>, %34, %cst_13 [0] : vector<8x1xf32> to vector<1xf32>
    %36 = vector.shape_cast %35 : vector<1xf32> to vector<1x1xf32>
    %37 = vector.shape_cast %36 : vector<1x1xf32> to vector<1x1x1xf32>
    %c0_14 = arith.constant 0 : index
    %c0_15 = arith.constant 0 : index
    %c0_16 = arith.constant 0 : index
    %38 = vector.load %arg4[%c0_14, %c0_15, %c0_16] : memref<1x1x1xf32, #tpu.memory_space<vmem>>, vector<1x1x1xf32>
    tpu.vector_store %arg4[%c0_14, %c0_15, %c0_16], %37 {strides = array<i32>} : memref<1x1x1xf32, #tpu.memory_space<vmem>>, vector<1x1x1xf32>,
    return
  }
  func.func @transform_0(%arg0: i32) -> (i32, i32) {
    %c0_i32 = arith.constant 0 : i32
    %c0_i32_0 = arith.constant 0 : i32
    return %arg0, %c0_i32 : i32, i32
  }
  func.func @transform_1(%arg0: i32) -> (i32, i32, i32) {
    %c0_i32 = arith.constant 0 : i32
    %c0_i32_0 = arith.constant 0 : i32
    %c0_i32_1 = arith.constant 0 : i32
    return %arg0, %c0_i32, %c0_i32_0 : i32, i32, i32
  }
  func.func @transform_2(%arg0: i32) -> (i32, i32, i32) {
    %c0_i32 = arith.constant 0 : i32
    %c0_i32_0 = arith.constant 0 : i32
    %c0_i32_1 = arith.constant 0 : i32
    return %arg0, %c0_i32, %c0_i32_0 : i32, i32, i32
  }
  func.func @transform_3(%arg0: i32) -> (i32, i32, i32) {
    %c0_i32 = arith.constant 0 : i32
    %c0_i32_0 = arith.constant 0 : i32
    %c0_i32_1 = arith.constant 0 : i32
    return %arg0, %c0_i32, %c0_i32_0 : i32, i32, i32
  }
}

</mosaic_0001>

<llo_original>
// kernel: tpu_custom_call.1
$region0: #{tpu_custom_call.1}
  #allocation0 [shape = 'u32[]', space=smem, size = 0x4, offset = 0x4, fixed_abs, tag = 'smem constant byte address 0x4 - core index']
  #allocation1 [shape = 'u32[72,128]{1,0:T(1,128)}', space=vmem, size = 0x9000, scoped, tag = 'internal scratch']
  %s0 = inlined_call_operand.hbm [shape: f32[8,32], index: 0, kind: input, shape index: {}]
  %s1 = inlined_call_operand.hbm [shape: f32[8,1,32], index: 1, kind: input, shape index: {}]
  %s2 = inlined_call_operand.hbm [shape: f32[8,8,32], index: 2, kind: input, shape index: {}]
  %s3 = inlined_call_operand.hbm [shape: f32[1,1,1], index: 3, kind: output, shape index: {}]
  %s4 = sld [smem:[#allocation0]]
  $region34: #{tpu_custom_call.1} parent=0
    _
  %s6 = ssub.s32 1, %s4
  %s7 = scalar_select 0, %s6, %s4
  $region1: #{tpu_custom_call.1} parent=0
    #allocation2 [shape = 'u8[4096]{0}', space=vmem, size = 0x1000, scoped, tag = 'input window, operand 0, single buffered']
    #allocation3 [shape = 's32[1]{0}', space=sflag, size = 0x4, scoped, tag = 'scoped memory for tpu_custom_call.1']
    #allocation4 [shape = 's32[1]{0}', space=sflag, size = 0x4, scoped, tag = 'scoped memory for tpu_custom_call.1']
    #allocation5 [shape = 'u8[4096]{0}', space=vmem, size = 0x1000, scoped, tag = 'input window, operand 1, single buffered']
    #allocation6 [shape = 's32[1]{0}', space=sflag, size = 0x4, scoped, tag = 'scoped memory for tpu_custom_call.1']
    #allocation7 [shape = 'u8[32768]{0}', space=vmem, size = 0x8000, scoped, tag = 'input window, operand 2, single buffered']
    #allocation8 [shape = 'u8[512]{0}', space=vmem, size = 0x400, scoped, tag = 'output window, operand 0, single buffered']
    %8 = vsyncpa [#allocation3], 0
    %9 = vsyncpa [#allocation6], 0
    %10 = vsyncpa [#allocation4], 0
    // Predicated region
    $region2: #{tpu_custom_call.1} parent=1 // pred_check
      _
    $region3: #{tpu_custom_call.1} parent=1 // pred_check_branch
      %12 = sbr.rel (0) target = $region5
    $region4: #{tpu_custom_call.1} parent=1 // pred_region
      %14 = vsyncadd [#allocation3], 0
      %s16 = sshll.u32 %s0, 4
      %s17 = int_to_ptr.hbm [resolvable:$true] %s16
      %s18 = sshll.u32 [#allocation2], 4
      %s19 = int_to_ptr.vmem [resolvable:$true] %s18
      %21 = dma.hbm_to_vmem [thread:$0]  %s17, 128, %s19, [#allocation3]
    $region5: #{tpu_custom_call.1} parent=1 // pred_fallthru
      _
    // Predicated region
    $region6: #{tpu_custom_call.1} parent=1 // pred_check
      _
    $region7: #{tpu_custom_call.1} parent=1 // pred_check_branch
      %23 = sbr.rel (0) target = $region9
    $region8: #{tpu_custom_call.1} parent=1 // pred_region
      %25 = vsyncadd [#allocation6], 0
      %s26 = sshll.u32 %s1, 4
      %s27 = int_to_ptr.hbm [resolvable:$true] %s26
      %s28 = sshll.u32 [#allocation5], 4
      %s29 = int_to_ptr.vmem [resolvable:$true] %s28
      %34 = dma.hbm_to_vmem [thread:$0]  %s27, 128, %s29, [#allocation6], 16, 16, 1
    $region9: #{tpu_custom_call.1} parent=1 // pred_fallthru
      _
    // Predicated region
    $region10: #{tpu_custom_call.1} parent=1 // pred_check
      _
    $region11: #{tpu_custom_call.1} parent=1 // pred_check_branch
      %36 = sbr.rel (0) target = $region13
    $region12: #{tpu_custom_call.1} parent=1 // pred_region
      %38 = vsyncadd [#allocation6], 0
      %s39 = sshll.u32 %s2, 4
      %s40 = int_to_ptr.hbm [resolvable:$true] %s39
      %s41 = sshll.u32 [#allocation7], 4
      %s42 = int_to_ptr.vmem [resolvable:$true] %s41
      %47 = dma.hbm_to_vmem [thread:$0]  %s40, 1024, %s42, [#allocation6], 128, 128, 8
    $region13: #{tpu_custom_call.1} parent=1 // pred_fallthru
      _
    // Predicated region
    $region14: #{tpu_custom_call.1} parent=1 // pred_check
      _
    $region15: #{tpu_custom_call.1} parent=1 // pred_check_branch
      %49 = sbr.rel (0) target = $region17
    $region16: #{tpu_custom_call.1} parent=1 // pred_region
      %51 = dma.done [#allocation3], 128
    $region17: #{tpu_custom_call.1} parent=1 // pred_fallthru
      _
    // Predicated region
    $region18: #{tpu_custom_call.1} parent=1 // pred_check
      _
    $region19: #{tpu_custom_call.1} parent=1 // pred_check_branch
      %53 = sbr.rel (0) target = $region21
    $region20: #{tpu_custom_call.1} parent=1 // pred_region
      %55 = dma.done [#allocation6], 128
    $region21: #{tpu_custom_call.1} parent=1 // pred_fallthru
      _
    // Predicated region
    $region22: #{tpu_custom_call.1} parent=1 // pred_check
      _
    $region23: #{tpu_custom_call.1} parent=1 // pred_check_branch
      %57 = sbr.rel (0) target = $region25
    $region24: #{tpu_custom_call.1} parent=1 // pred_region
      %59 = dma.done [#allocation6], 1024
    $region25: #{tpu_custom_call.1} parent=1 // pred_fallthru
      _
    %v60 = vld [vmem:[#allocation2] sm:$0xff]
    %v61 = vmul.f32 %v60, 14.285714
    %v62 = vld [vmem:[#allocation5] sm:$0x1]
    %v63 = vld [vmem:[#allocation5 + $0x1] sm:$0x1]
    %v64 = vld [vmem:[#allocation5 + $0x2] sm:$0x1]
    %v65 = vld [vmem:[#allocation5 + $0x3] sm:$0x1]
    %v66 = vld [vmem:[#allocation5 + $0x4] sm:$0x1]
    %v67 = vld [vmem:[#allocation5 + $0x5] sm:$0x1]
    %v68 = vld [vmem:[#allocation5 + $0x6] sm:$0x1]
    %v69 = vld [vmem:[#allocation5 + $0x7] sm:$0x1]
    %v70 = vld [vmem:[#allocation7] sm:$0xff]
    %v71 = vld [vmem:[#allocation7 + $0x8] sm:$0xff]
    %v72 = vld [vmem:[#allocation7 + $0x10] sm:$0xff]
    %v73 = vld [vmem:[#allocation7 + $0x18] sm:$0xff]
    %v74 = vld [vmem:[#allocation7 + $0x20] sm:$0xff]
    %v75 = vld [vmem:[#allocation7 + $0x28] sm:$0xff]
    %v76 = vld [vmem:[#allocation7 + $0x30] sm:$0xff]
    %v77 = vld [vmem:[#allocation7 + $0x38] sm:$0xff]
    %86 = vst [vmem:[#allocation1] ss:$9 sm:$0xff] %v62
    %s87 = scalar_lea.vmem [#allocation1], 1
    %88 = vst [vmem:[%s87] ss:$9 sm:$0xff] %v63
    %s89 = scalar_lea.vmem [#allocation1], 2
    %90 = vst [vmem:[%s89] ss:$9 sm:$0xff] %v64
    %s91 = scalar_lea.vmem [#allocation1], 3
    %92 = vst [vmem:[%s91] ss:$9 sm:$0xff] %v65
    %s93 = scalar_lea.vmem [#allocation1], 4
    %94 = vst [vmem:[%s93] ss:$9 sm:$0xff] %v66
    %s95 = scalar_lea.vmem [#allocation1], 5
    %96 = vst [vmem:[%s95] ss:$9 sm:$0xff] %v67
    %s97 = scalar_lea.vmem [#allocation1], 6
    %98 = vst [vmem:[%s97] ss:$9 sm:$0xff] %v68
    %s99 = scalar_lea.vmem [#allocation1], 7
    %100 = vst [vmem:[%s99] ss:$9 sm:$0xff] %v69
    %v101 = vld [vmem:[#allocation1] sm:$0xff]
    %v103 = vmul.f32 %v61, %v101
    %vm104 = vcmask 261120
    %v105 = vsel %vm104, %v103, 0.0
    %106 = vadd.xlane.f32.xlu0 %v105
    %v107 = vpop.xlane.xlu0 %106
    %v109 = vrot.slane %v61, 1
    %v110 = vrot.slane %v61, 2
    %v111 = vrot.slane %v61, 3
    %v112 = vrot.slane %v61, 4
    %v113 = vrot.slane %v61, 5
    %v114 = vrot.slane %v61, 6
    %v115 = vrot.slane %v61, 7
    %v116 = vperm.slane %v61, 0
    %v117 = vperm.slane %v109, 0
    %v118 = vperm.slane %v110, 0
    %v119 = vperm.slane %v111, 0
    %v120 = vperm.slane %v112, 0
    %v121 = vperm.slane %v113, 0
    %v122 = vperm.slane %v114, 0
    %v123 = vperm.slane %v115, 0
    %v132 = vmul.f32 %v116, %v70
    %v133 = vmul.f32 %v117, %v71
    %v134 = vmul.f32 %v118, %v72
    %v135 = vmul.f32 %v119, %v73
    %v136 = vmul.f32 %v120, %v74
    %v137 = vmul.f32 %v121, %v75
    %v138 = vmul.f32 %v122, %v76
    %v139 = vmul.f32 %v123, %v77
    %v140 = vsel %vm104, %v132, 0.0
    %141 = vadd.xlane.f32.xlu0 %v140
    %v142 = vpop.xlane.xlu0 %141
    %v143 = vsel %vm104, %v133, 0.0
    %144 = vadd.xlane.f32.xlu0 %v143
    %v145 = vpop.xlane.xlu0 %144
    %v146 = vsel %vm104, %v134, 0.0
    %147 = vadd.xlane.f32.xlu0 %v146
    %v148 = vpop.xlane.xlu0 %147
    %v149 = vsel %vm104, %v135, 0.0
    %150 = vadd.xlane.f32.xlu0 %v149
    %v151 = vpop.xlane.xlu0 %150
    %v152 = vsel %vm104, %v136, 0.0
    %153 = vadd.xlane.f32.xlu0 %v152
    %v154 = vpop.xlane.xlu0 %153
    %v155 = vsel %vm104, %v137, 0.0
    %156 = vadd.xlane.f32.xlu0 %v155
    %v157 = vpop.xlane.xlu0 %156
    %v158 = vsel %vm104, %v138, 0.0
    %159 = vadd.xlane.f32.xlu0 %v158
    %v160 = vpop.xlane.xlu0 %159
    %v161 = vsel %vm104, %v139, 0.0
    %162 = vadd.xlane.f32.xlu0 %v161
    %v163 = vpop.xlane.xlu0 %162
    %v172 = vlaneseq
    %v173 = vand.u32 %v172, 127
    %v174 = vperm.slane %v142, %v173
    %v175 = vperm.slane %v145, %v173
    %v176 = vperm.slane %v148, %v173
    %v177 = vperm.slane %v151, %v173
    %v178 = vperm.slane %v154, %v173
    %v179 = vperm.slane %v157, %v173
    %v180 = vperm.slane %v160, %v173
    %v181 = vperm.slane %v163, %v173
    %vm182 = vcmask 1041409
    %v183 = vsel %vm182, %v175, %v174
    %vm184 = vcmask 1042434
    %v185 = vsel %vm184, %v176, %v183
    %vm186 = vcmask 1043459
    %v187 = vsel %vm186, %v177, %v185
    %vm188 = vcmask 1044484
    %v189 = vsel %vm188, %v178, %v187
    %vm190 = vcmask 1045509
    %v191 = vsel %vm190, %v179, %v189
    %vm192 = vcmask 1046534
    %v193 = vsel %vm192, %v180, %v191
    %vm194 = vcmask 1047559
    %v195 = vsel %vm194, %v181, %v193
    %vm197 = vcmask 64512
    %v198 = vsel %vm197, %v195, -inf
    %199 = vmax.xlane.f32.xlu0 %v198
    %v200 = vpop.xlane.xlu0 %199
    %v201 = vmax.f32 %v200, %v107
    %v202 = vsub.f32 %v107, %v201
    %v203 = vmul.f32 %v202, 1.442695
    %v204 = vpow.pop %v203
    %v206 = vperm.slane %v201, 0
    %v207 = vperm.slane %v201, 1
    %v208 = vperm.slane %v201, 2
    %v209 = vperm.slane %v201, 3
    %v210 = vperm.slane %v201, 4
    %v211 = vperm.slane %v201, 5
    %v212 = vperm.slane %v201, 6
    %v213 = vperm.slane %v201, 7
    %v222 = vsub.f32 %v142, %v206
    %v223 = vsub.f32 %v145, %v207
    %v224 = vsub.f32 %v148, %v208
    %v225 = vsub.f32 %v151, %v209
    %v226 = vsub.f32 %v154, %v210
    %v227 = vsub.f32 %v157, %v211
    %v228 = vsub.f32 %v160, %v212
    %v229 = vsub.f32 %v163, %v213
    %v230 = vmul.f32 %v222, 1.442695
    %v231 = vpow.pop %v230
    %v232 = vmul.f32 %v223, 1.442695
    %v233 = vpow.pop %v232
    %v234 = vmul.f32 %v224, 1.442695
    %v235 = vpow.pop %v234
    %v236 = vmul.f32 %v225, 1.442695
    %v237 = vpow.pop %v236
    %v238 = vmul.f32 %v226, 1.442695
    %v239 = vpow.pop %v238
    %v240 = vmul.f32 %v227, 1.442695
    %v241 = vpow.pop %v240
    %v242 = vmul.f32 %v228, 1.442695
    %v243 = vpow.pop %v242
    %v244 = vmul.f32 %v229, 1.442695
    %v245 = vpow.pop %v244
    %254 = vset.pattern.permute.xlu0 0
    %255 = vperm.xlu0 %254, %v231
    %v256 = vpop.permute.xlu0 %255
    %257 = vset.pattern.permute.xlu0 0
    %258 = vperm.xlu0 %257, %v233
    %v259 = vpop.permute.xlu0 %258
    %260 = vset.pattern.permute.xlu0 0
    %261 = vperm.xlu0 %260, %v235
    %v262 = vpop.permute.xlu0 %261
    %263 = vset.pattern.permute.xlu0 0
    %264 = vperm.xlu0 %263, %v237
    %v265 = vpop.permute.xlu0 %264
    %266 = vset.pattern.permute.xlu0 0
    %267 = vperm.xlu0 %266, %v239
    %v268 = vpop.permute.xlu0 %267
    %269 = vset.pattern.permute.xlu0 0
    %270 = vperm.xlu0 %269, %v241
    %v271 = vpop.permute.xlu0 %270
    %272 = vset.pattern.permute.xlu0 0
    %273 = vperm.xlu0 %272, %v243
    %v274 = vpop.permute.xlu0 %273
    %275 = vset.pattern.permute.xlu0 0
    %276 = vperm.xlu0 %275, %v245
    %v277 = vpop.permute.xlu0 %276
    %v278 = vperm.slane %v256, %v173
    %v279 = vperm.slane %v259, %v173
    %v280 = vperm.slane %v262, %v173
    %v281 = vperm.slane %v265, %v173
    %v282 = vperm.slane %v268, %v173
    %v283 = vperm.slane %v271, %v173
    %v284 = vperm.slane %v274, %v173
    %v285 = vperm.slane %v277, %v173
    %v286 = vsel %vm182, %v279, %v278
    %v287 = vsel %vm184, %v280, %v286
    %v288 = vsel %vm186, %v281, %v287
    %v289 = vsel %vm188, %v282, %v288
    %v290 = vsel %vm190, %v283, %v289
    %v291 = vsel %vm192, %v284, %v290
    %v292 = vsel %vm194, %v285, %v291
    %v294 = vsel %vm197, %v292, 0.0
    %295 = vadd.xlane.f32.xlu0 %v294
    %v296 = vpop.xlane.xlu0 %295
    %v297 = vadd.f32 %v204, %v296
    %v298 = vlog2.pop %v297
    %v299 = vmul.f32 %v298, 0.6931472
    %v300 = vadd.f32 %v299, %v201
    %v301 = vsub.f32 %v300, %v107
    %s302 = smul.u32 0, 8
    %v303 = vlaneseq
    %v304 = vshrl.u32 %v303, 7
    %v305 = vstv %s302
    %v306 = vadd.s32 %v305, %v304
    %vm307 = vcmp.lt.s32.totalorder %v306, 8
    %v308 = vsel %vm307, %v301, 0.0
    %v309 = vrot.slane %v308, 4
    %v310 = vadd.f32 %v308, %v309
    %v311 = vrot.slane %v310, 2
    %v312 = vadd.f32 %v310, %v311
    %v313 = vrot.slane %v312, 1
    %v314 = vadd.f32 %v312, %v313
    %vm315 = vcmask 0
    %316 = vst.msk [vmem:[#allocation8] sm:$0x1] %vm315, %v314
    // Predicated region
    $region26: #{tpu_custom_call.1} parent=1 // pred_check
      _
    $region27: #{tpu_custom_call.1} parent=1 // pred_check_branch
      %318 = sbr.rel (0) target = $region29
    $region28: #{tpu_custom_call.1} parent=1 // pred_region
      %320 = vsyncadd [#allocation4], 0
      %s322 = sshll.u32 [#allocation8], 4
      %s323 = int_to_ptr.vmem [resolvable:$true] %s322
      %s324 = sshll.u32 %s3, 4
      %s325 = int_to_ptr.hbm [resolvable:$true] %s324
      %327 = dma.vmem_to_hbm [thread:$0]  %s323, 16, %s325, [#allocation4]
    $region29: #{tpu_custom_call.1} parent=1 // pred_fallthru
      _
    // Predicated region
    $region30: #{tpu_custom_call.1} parent=1 // pred_check
      _
    $region31: #{tpu_custom_call.1} parent=1 // pred_check_branch
      %329 = sbr.rel (0) target = $region33
    $region32: #{tpu_custom_call.1} parent=1 // pred_region
      %331 = dma.done [#allocation4], 16
    $region33: #{tpu_custom_call.1} parent=1 // pred_fallthru
      _
    %332 = vsyncpa [#allocation3], 1
    %333 = vsyncpa [#allocation6], 1
    %334 = vsyncpa [#allocation4], 1

</llo_original>
